<compile_context>
chip_gen: v7x
topology: tpu7x:2x2x1
jax: 0.10.0
libtpu: 0.0.40
codegen_flags: <defaults>
</compile_context>

<pallas_src>
import jax
import jax.numpy as jnp
from jax import lax
from jax.experimental import pallas as pl
from jax.experimental.pallas import tpu as pltpu


# ---------------------------------------------------------------------------
# Kernels
# ---------------------------------------------------------------------------
def _linear_f32(x, w, b):
    # logits = x @ W.T + b  (torch.nn.Linear semantics), expressed as a
    # contraction over the last dim of BOTH operands so the MXU is fed
    # directly with lane-contiguous tiles (no transpose).
    return lax.dot_general(
        x, w,
        dimension_numbers=(((1,), (1,)), ((), ())),
        preferred_element_type=jnp.float32,
    ) + b


def _logits_kernel(x_ref, w_ref, b_ref, out_ref):
    out_ref[...] = _linear_f32(x_ref[...], w_ref[...], b_ref[...]).astype(out_ref.dtype)


def _fused_logits_loss_kernel(x_ref, w_ref, b_ref, y_ref, logits_ref, loss_ref):
    logits = _linear_f32(x_ref[...], w_ref[...], b_ref[...])        # (B, C) f32
    logits_ref[...] = logits.astype(logits_ref.dtype)

    # Mean cross-entropy vs integer labels (numerically stable log-sum-exp).
    m = jnp.max(logits, axis=-1, keepdims=True)                     # (B, 1)
    lse = m + jnp.log(jnp.sum(jnp.exp(logits - m), axis=-1, keepdims=True))
    cls_idx = lax.broadcasted_iota(jnp.int32, logits.shape, 1)      # (B, C)
    picked = jnp.sum(jnp.where(cls_idx == y_ref[...], logits, 0.0),
                     axis=-1, keepdims=True)                        # (B, 1)
    per_example = lse - picked                                      # (B, 1)
    # Scalar loss goes straight to SMEM (no padded VMEM tile / masked vst).
    loss_ref[0] = jnp.sum(per_example) / jnp.float32(per_example.shape[0])


# ---------------------------------------------------------------------------
# Wrappers
# ---------------------------------------------------------------------------
@jax.jit
def torch_model_logits(x, w, b):
    B, D = x.shape
    C = w.shape[0]
    b2 = b.reshape(1, C)
    return pl.pallas_call(
        _logits_kernel,
        out_shape=jax.ShapeDtypeStruct((B, C), jnp.float32),
        grid=(1,),
        in_specs=[
            pl.BlockSpec((B, D), lambda i: (0, 0)),
            pl.BlockSpec((C, D), lambda i: (0, 0)),
            pl.BlockSpec((1, C), lambda i: (0, 0)),
        ],
        out_specs=pl.BlockSpec((B, C), lambda i: (0, 0)),
        compiler_params=pltpu.CompilerParams(dimension_semantics=("arbitrary",)),
    )(x, w, b2)


@jax.jit
def torch_model_logits_and_loss(x, w, b, y):
    """Single fused pallas_call: one matmul pass produces logits AND the loss."""
    B, D = x.shape
    C = w.shape[0]
    b2 = b.reshape(1, C)
    y2 = y.astype(jnp.int32).reshape(B, 1)
    logits, loss = pl.pallas_call(
        _fused_logits_loss_kernel,
        out_shape=(
            jax.ShapeDtypeStruct((B, C), jnp.float32),
            jax.ShapeDtypeStruct((1,), jnp.float32),
        ),
        grid=(1,),
        in_specs=[
            pl.BlockSpec((B, D), lambda i: (0, 0)),
            pl.BlockSpec((C, D), lambda i: (0, 0)),
            pl.BlockSpec((1, C), lambda i: (0, 0)),
            pl.BlockSpec((B, 1), lambda i: (0, 0)),
        ],
        out_specs=(
            pl.BlockSpec((B, C), lambda i: (0, 0)),
            pl.BlockSpec(memory_space=pltpu.MemorySpace.SMEM),
        ),
        compiler_params=pltpu.CompilerParams(dimension_semantics=("arbitrary",)),
    )(x, w, b2, y2)
    return logits, loss[0]


def torch_model_forward(x, w, b, y=None):
    """Matches TorchModel.forward: logits if y is None, else mean CE loss."""
    if y is None:
        return torch_model_logits(x, w, b)
    _, loss = torch_model_logits_and_loss(x, w, b, y)
    return loss


# ---------------------------------------------------------------------------
# Main
# ---------------------------------------------------------------------------
if __name__ == "__main__":
    batch, input_size, num_classes = 8, 32, 8

    key = jax.random.PRNGKey(0)
    kx, ky, kw, kb = jax.random.split(key, 4)

    # Deterministic parameter init (shapes match nn.Linear(input_size, num_classes)).
    bound = 1.0 / (input_size ** 0.5)
    w = jax.random.uniform(kw, (num_classes, input_size), jnp.float32, -bound, bound)
    b = jax.random.uniform(kb, (num_classes,), jnp.float32, -bound, bound)

    x = jax.random.normal(kx, (batch, input_size), jnp.float32)
    y = jax.random.randint(ky, (batch,), 0, num_classes, jnp.int32)

    # Inference path (y is None): logits from the logits-only kernel.
    logits = torch_model_forward(x, w, b)
    jax.block_until_ready(logits)

    # Training path (y provided): one fused pallas_call gives logits + loss.
    fused_logits, loss = torch_model_logits_and_loss(x, w, b, y)
    jax.block_until_ready((fused_logits, loss))

    # Sanity check against pure-JAX reference.
    ref_logits = x @ w.T + b
    ref_lse = jax.nn.logsumexp(ref_logits, axis=-1)
    ref_loss = jnp.mean(ref_lse - ref_logits[jnp.arange(batch), y])
    assert jnp.allclose(logits, ref_logits, atol=1e-5, rtol=1e-5)
    assert jnp.allclose(fused_logits, ref_logits, atol=1e-5, rtol=1e-5)
    assert jnp.allclose(loss, ref_loss, atol=1e-5, rtol=1e-5)

    print("KERNEL_OK")
</pallas_src>

<mosaic_0001>
module attributes {stable_mosaic.version = 11 : i64} {
  func.func @_logits_kernel(%arg0: i32, %arg1: memref<8x32xf32, #tpu.memory_space<vmem>>, %arg2: memref<8x32xf32, #tpu.memory_space<vmem>>, %arg3: memref<1x8xf32, #tpu.memory_space<vmem>>, %arg4: memref<8x8xf32, #tpu.memory_space<vmem>>) attributes {dimension_semantics = [#tpu.dimension_semantics<arbitrary>], iteration_bounds = array<i64: 1>, scalar_prefetch = 0 : i64, scratch_operands = 0 : i64, tpu.core_type = #tpu.core_type<tc>, window_params = [{pipeline_mode = #tpu.pipeline_mode<synchronous>, transform_indices = @transform_0, window_bounds = array<i64: 8, 32>}, {pipeline_mode = #tpu.pipeline_mode<synchronous>, transform_indices = @transform_1, window_bounds = array<i64: 8, 32>}, {pipeline_mode = #tpu.pipeline_mode<synchronous>, transform_indices = @transform_2, window_bounds = array<i64: 1, 8>}, {pipeline_mode = #tpu.pipeline_mode<synchronous>, transform_indices = @transform_3, window_bounds = array<i64: 8, 8>}]} {
    %c0 = arith.constant 0 : index
    %c0_0 = arith.constant 0 : index
    %0 = vector.load %arg1[%c0, %c0_0] : memref<8x32xf32, #tpu.memory_space<vmem>>, vector<8x32xf32>
    %c0_1 = arith.constant 0 : index
    %c0_2 = arith.constant 0 : index
    %1 = vector.load %arg2[%c0_1, %c0_2] : memref<8x32xf32, #tpu.memory_space<vmem>>, vector<8x32xf32>
    %c0_3 = arith.constant 0 : index
    %c0_4 = arith.constant 0 : index
    %2 = vector.load %arg3[%c0_3, %c0_4] : memref<1x8xf32, #tpu.memory_space<vmem>>, vector<1x8xf32>
    %cst = arith.constant dense<0.000000e+00> : vector<8x8xf32>
    %3 = tpu.matmul %0, %1, %cst {dimension_numbers = #tpu.dot_dimension_numbers<[1], [1], [0], [0], [0, 0, 1, 0], [], []>} : vector<8x32xf32>, vector<8x32xf32>, vector<8x8xf32> -> vector<8x8xf32>
    %4 = vector.broadcast %2 : vector<1x8xf32> to vector<8x8xf32>
    %5 = arith.addf %3, %4 : vector<8x8xf32>
    %c0_5 = arith.constant 0 : index
    %c0_6 = arith.constant 0 : index
    %6 = vector.load %arg4[%c0_5, %c0_6] : memref<8x8xf32, #tpu.memory_space<vmem>>, vector<8x8xf32>
    tpu.vector_store %arg4[%c0_5, %c0_6], %5 {strides = array<i32>} : memref<8x8xf32, #tpu.memory_space<vmem>>, vector<8x8xf32>,
    return
  }
  func.func @transform_0(%arg0: i32) -> (i32, i32) {
    %c0_i32 = arith.constant 0 : i32
    %c0_i32_0 = arith.constant 0 : i32
    %c0_i32_1 = arith.constant 0 : i32
    return %c0_i32, %c0_i32_0 : i32, i32
  }
  func.func @transform_1(%arg0: i32) -> (i32, i32) {
    %c0_i32 = arith.constant 0 : i32
    %c0_i32_0 = arith.constant 0 : i32
    %c0_i32_1 = arith.constant 0 : i32
    return %c0_i32, %c0_i32_0 : i32, i32
  }
  func.func @transform_2(%arg0: i32) -> (i32, i32) {
    %c0_i32 = arith.constant 0 : i32
    %c0_i32_0 = arith.constant 0 : i32
    %c0_i32_1 = arith.constant 0 : i32
    return %c0_i32, %c0_i32_0 : i32, i32
  }
  func.func @transform_3(%arg0: i32) -> (i32, i32) {
    %c0_i32 = arith.constant 0 : i32
    %c0_i32_0 = arith.constant 0 : i32
    %c0_i32_1 = arith.constant 0 : i32
    return %c0_i32, %c0_i32_0 : i32, i32
  }
}

</mosaic_0001>

<llo_original>
// kernel: torch_model_logits.1
$region0: #{torch_model_logits.1}
  #allocation0 [shape = 'u32[]', space=smem, size = 0x4, offset = 0x4, fixed_abs, tag = 'smem constant byte address 0x4 - core index']
  #allocation1 [shape = 'u32[144,128]{1,0:T(1,128)}', space=vmem, size = 0x12000, scoped, tag = 'internal scratch']
  %s0 = inlined_call_operand.hbm [shape: f32[8,32], index: 0, kind: input, shape index: {}]
  %s1 = inlined_call_operand.hbm [shape: f32[8,32], index: 1, kind: input, shape index: {}]
  %s2 = inlined_call_operand.vmem [shape: f32[1,8], index: 2, kind: input, shape index: {}]
  %s3 = inlined_call_operand.hbm [shape: f32[8,8], index: 3, kind: output, shape index: {}]
  %s4 = sld [smem:[#allocation0]]
  $region30: #{torch_model_logits.1} parent=0
    _
  %s6 = ssub.s32 1, %s4
  %s7 = scalar_select 0, %s6, %s4
  $region1: #{torch_model_logits.1} parent=0
    #allocation2 [shape = 'u8[4096]{0}', space=vmem, size = 0x1000, scoped, tag = 'input window, operand 0, single buffered']
    #allocation3 [shape = 's32[1]{0}', space=sflag, size = 0x4, scoped, tag = 'scoped memory for torch_model_logits.1']
    #allocation4 [shape = 's32[1]{0}', space=sflag, size = 0x4, scoped, tag = 'scoped memory for torch_model_logits.1']
    #allocation5 [shape = 'u8[4096]{0}', space=vmem, size = 0x1000, scoped, tag = 'input window, operand 1, single buffered']
    #allocation6 [shape = 's32[1]{0}', space=sflag, size = 0x4, scoped, tag = 'scoped memory for torch_model_logits.1']
    #allocation7 [shape = 'u8[4096]{0}', space=vmem, size = 0x1000, scoped, tag = 'output window, operand 0, single buffered']
    %8 = vsyncpa [#allocation3], 0
    %9 = vsyncpa [#allocation6], 0
    %10 = vsyncpa [#allocation4], 0
    // Predicated region
    $region2: #{torch_model_logits.1} parent=1 // pred_check
      _
    $region3: #{torch_model_logits.1} parent=1 // pred_check_branch
      %12 = sbr.rel (0) target = $region5
    $region4: #{torch_model_logits.1} parent=1 // pred_region
      %s14 = ssub.s32 128, 128
      %15 = vsyncadd [#allocation3], %s14
      %s17 = sshll.u32 [#allocation2], 4
      %s18 = int_to_ptr.vmem [resolvable:$true] %s17
      %20 = dma.hbm_to_vmem [thread:$0]  %s0, 128, %s18, [#allocation3]
    $region5: #{torch_model_logits.1} parent=1 // pred_fallthru
      _
    // Predicated region
    $region6: #{torch_model_logits.1} parent=1 // pred_check
      _
    $region7: #{torch_model_logits.1} parent=1 // pred_check_branch
      %22 = sbr.rel (0) target = $region9
    $region8: #{torch_model_logits.1} parent=1 // pred_region
      %s24 = ssub.s32 128, 128
      %25 = vsyncadd [#allocation6], %s24
      %s27 = sshll.u32 [#allocation5], 4
      %s28 = int_to_ptr.vmem [resolvable:$true] %s27
      %30 = dma.hbm_to_vmem [thread:$0]  %s1, 128, %s28, [#allocation6]
    $region9: #{torch_model_logits.1} parent=1 // pred_fallthru
      _
    // Predicated region
    $region10: #{torch_model_logits.1} parent=1 // pred_check
      _
    $region11: #{torch_model_logits.1} parent=1 // pred_check_branch
      %32 = sbr.rel (0) target = $region13
    $region12: #{torch_model_logits.1} parent=1 // pred_region
      _
    $region13: #{torch_model_logits.1} parent=1 // pred_fallthru
      _
    // Predicated region
    $region14: #{torch_model_logits.1} parent=1 // pred_check
      _
    $region15: #{torch_model_logits.1} parent=1 // pred_check_branch
      %34 = sbr.rel (0) target = $region17
    $region16: #{torch_model_logits.1} parent=1 // pred_region
      %35 = dma.done [#allocation3], 128
    $region17: #{torch_model_logits.1} parent=1 // pred_fallthru
      _
    // Predicated region
    $region18: #{torch_model_logits.1} parent=1 // pred_check
      _
    $region19: #{torch_model_logits.1} parent=1 // pred_check_branch
      %37 = sbr.rel (0) target = $region21
    $region20: #{torch_model_logits.1} parent=1 // pred_region
      %38 = dma.done [#allocation6], 128
    $region21: #{torch_model_logits.1} parent=1 // pred_fallthru
      _
    %v39 = vld [vmem:[#allocation2] sm:$0xff]
    %v40 = vld [vmem:[#allocation5] sm:$0xff]
    %v41 = vld [vmem:[%s2] sm:$0x1]
    %v43 = vlaneseq
    %v44 = vshrl.u32 %v43, 7
    %v45 = vsub.s32 0, %v44
    %v46 = vrot.slane %v41, %v45
    %vm48 = vcmask 261120
    %v50 = vsel %vm48, %v39, 0
    %v53 = vsel %vm48, %v40, 0
    %55 = vmatprep.subr.mxu0 0.0
    %56 = vmatpush1.xpose.msra.mxu0 %v53
    %57 = vmatprep.subr.mxu0 0.0
    %58 = vmatpush1.xpose.msra.mxu0 0.0
    %59 = vmatprep.subr.mxu0 0.0
    %60 = vmatpush1.xpose.msra.mxu0 0.0
    %61 = vmatprep.subr.mxu0 0.0
    %62 = vmatpush1.xpose.msra.mxu0 0.0
    %63 = vmatprep.subr.mxu0 0.0
    %64 = vmatpush1.xpose.msra.mxu0 0.0
    %65 = vmatprep.subr.mxu0 0.0
    %66 = vmatpush1.xpose.msra.mxu0 0.0
    %67 = vmatprep.subr.mxu0 0.0
    %68 = vmatpush1.xpose.msra.mxu0 0.0
    %69 = vmatprep.subr.mxu0 0.0
    %70 = vmatpush1.xpose.msra.mxu0 0.0
    %71 = vmatprep.subr.mxu0 0.0
    %72 = vmatpush1.xpose.msra.mxu0 0.0
    %73 = vmatprep.subr.mxu0 0.0
    %74 = vmatpush1.xpose.msra.mxu0 0.0
    %75 = vmatprep.subr.mxu0 0.0
    %76 = vmatpush1.xpose.msra.mxu0 0.0
    %77 = vmatprep.subr.mxu0 0.0
    %78 = vmatpush1.xpose.msra.mxu0 0.0
    %79 = vmatprep.subr.mxu0 0.0
    %80 = vmatpush1.xpose.msra.mxu0 0.0
    %81 = vmatprep.subr.mxu0 0.0
    %82 = vmatpush1.xpose.msra.mxu0 0.0
    %83 = vmatprep.subr.mxu0 0.0
    %84 = vmatpush1.xpose.msra.mxu0 0.0
    %85 = vmatprep.subr.mxu0 0.0
    %86 = vmatpush1.xpose.msra.mxu0 0.0
    %87 = vmatprep.subr.mxu0 0.0
    %88 = vmatpush1.xpose.msra.mxu0 0.0
    %89 = vmatprep.subr.mxu0 0.0
    %90 = vmatpush1.xpose.msra.mxu0 0.0
    %91 = vmatprep.subr.mxu0 0.0
    %92 = vmatpush1.xpose.msra.mxu0 0.0
    %93 = vmatprep.subr.mxu0 0.0
    %94 = vmatpush1.xpose.msra.mxu0 0.0
    %95 = vmatprep.subr.mxu0 0.0
    %96 = vmatpush1.xpose.msra.mxu0 0.0
    %97 = vmatprep.subr.mxu0 0.0
    %98 = vmatpush1.xpose.msra.mxu0 0.0
    %99 = vmatprep.subr.mxu0 0.0
    %100 = vmatpush1.xpose.msra.mxu0 0.0
    %101 = vmatprep.subr.mxu0 0.0
    %102 = vmatpush1.xpose.msra.mxu0 0.0
    %103 = vmatprep.subr.mxu0 0.0
    %104 = vmatpush1.xpose.msra.mxu0 0.0
    %105 = vmatprep.subr.mxu0 0.0
    %106 = vmatpush1.xpose.msra.mxu0 0.0
    %107 = vmatprep.subr.mxu0 0.0
    %108 = vmatpush1.xpose.msra.mxu0 0.0
    %109 = vmatprep.subr.mxu0 0.0
    %110 = vmatpush1.xpose.msra.mxu0 0.0
    %111 = vmatprep.subr.mxu0 0.0
    %112 = vmatpush1.xpose.msra.mxu0 0.0
    %113 = vmatprep.subr.mxu0 0.0
    %114 = vmatpush1.xpose.msra.mxu0 0.0
    %115 = vmatprep.subr.mxu0 0.0
    %116 = vmatpush1.xpose.msra.mxu0 0.0
    %117 = vmatprep.subr.mxu0 0.0
    %118 = vmatpush1.xpose.msra.mxu0 0.0
    %119 = vmatprep.mubr.f32.mxu0 0.0
    %120 = vmatmul.mubr.f32.gmra.mrb[0].mxu0 %v50
    %v121 = vpop.f32.mrb[0].mxu0
    %v122 = vadd.f32 %v46, %v121
    %v123 = vpop.f32.mrb[0].mxu0
    %124 = vdwg.mxu0
    %vm125 = vcmask 64512
    %126 = vst.msk [vmem:[#allocation7] sm:$0xff] %vm125, %v122
    // Predicated region
    $region22: #{torch_model_logits.1} parent=1 // pred_check
      _
    $region23: #{torch_model_logits.1} parent=1 // pred_check_branch
      %128 = sbr.rel (0) target = $region25
    $region24: #{torch_model_logits.1} parent=1 // pred_region
      %s130 = ssub.s32 128, 128
      %131 = vsyncadd [#allocation4], %s130
      %s133 = sshll.u32 [#allocation7], 4
      %s134 = int_to_ptr.vmem [resolvable:$true] %s133
      %136 = dma.vmem_to_hbm [thread:$0]  %s134, 128, %s3, [#allocation4]
    $region25: #{torch_model_logits.1} parent=1 // pred_fallthru
      _
    // Predicated region
    $region26: #{torch_model_logits.1} parent=1 // pred_check
      _
    $region27: #{torch_model_logits.1} parent=1 // pred_check_branch
      %138 = sbr.rel (0) target = $region29
    $region28: #{torch_model_logits.1} parent=1 // pred_region
      %139 = dma.done [#allocation4], 128
    $region29: #{torch_model_logits.1} parent=1 // pred_fallthru
      _
    %140 = vsyncpa [#allocation3], 1
    %141 = vsyncpa [#allocation6], 1
    %142 = vsyncpa [#allocation4], 1

</llo_original>
